<compile_context>
chip_gen: v7x
topology: tpu7x:2x2x1
jax: 0.10.0
libtpu: 0.0.40
codegen_flags: <defaults>
</compile_context>

<pallas_src>
import functools

import jax
import jax.numpy as jnp
from jax.experimental import pallas as pl
from jax.experimental.pallas import tpu as pltpu


LAMB = 0.9       # default lamb of pluld_loss
_N_PAR = 2       # leading 'parallel' grid axis (uses both TensorCores on v7x)


def _pluld_loss_kernel(pred_ref, label_ref, weight_ref, out_ref, *,
                       n_rows, tm, blocks_per_core, lamb):
    p = pl.program_id(0)          # parallel (per-core) axis
    i = pl.program_id(1)          # reduction axis over row blocks

    @pl.when(i == 0)
    def _():
        out_ref[...] = jnp.zeros_like(out_ref)

    pred = pred_ref[...].astype(jnp.float32)        # (tm, C)
    lab = label_ref[...]                            # (tm, 1) int32
    w = weight_ref[...].astype(jnp.float32)         # (tm, 1)

    c = pred.shape[1]

    # _expand_binary_labels: y[r, lab[r]-1] = 1  iff  lab[r] >= 1
    col = jax.lax.broadcasted_iota(jnp.int32, (tm, c), 1)
    is_pos = (lab >= 1) & (col == lab - 1)

    # Stable log-sigmoid (one exp + one log per element):
    #   log sigma(x)     = min(x, 0) - log(1 + exp(-|x|))
    #   log(1 - sigma(x)) = log sigma(x) - x
    log_sig = jnp.minimum(pred, 0.0) - jnp.log(1.0 + jnp.exp(-jnp.abs(pred)))

    # loss = -( y*log_sig + lamb*(1-y)*(log_sig - x) )
    #      = lamb*(1-y)*x - (y + lamb*(1-y))*log_sig
    coef = jnp.where(is_pos, 1.0, lamb)        # y + lamb*(1-y)
    lam_1my = jnp.where(is_pos, 0.0, lamb)     # lamb*(1-y)
    loss = lam_1my * pred - coef * log_sig

    # per-sample weight + mask rows beyond n (remainder / duplicated edge blocks)
    row0 = (p * blocks_per_core + i) * tm
    rows = row0 + jax.lax.broadcasted_iota(jnp.int32, (tm, 1), 0)
    loss = jnp.where(rows < n_rows, loss * w, 0.0)

    # Lane-preserving partial reduce: splitting the sublane-major axis keeps the
    # layout, so this is pure VALU adds (no per-step cross-lane XLU work).
    out_ref[0] += jnp.sum(loss.reshape(tm // 8, 8, c), axis=0)


def _pick_tile(n, c, itemsize):
    """Row tile sized so double-buffered (lane-padded) inputs + temporaries ~<=16 MiB."""
    c_pad = ((c + 127) // 128) * 128
    # pred double-buffered + label/weight double-buffered + ~3 f32 full-tile temps,
    # all counted at the lane-padded VMEM footprint.
    row_bytes = 2 * (c_pad * itemsize + 2 * 128 * 4) + 3 * c_pad * 4
    tm = (16 * 1024 * 1024) // max(1, row_bytes)
    tm = max(8, min(int(tm), 8192))
    tm = (tm // 8) * 8
    n_round = ((n + 7) // 8) * 8
    return min(tm, n_round)


def weighted_cross_entropy_loss(cls_score, label, weight=None, loss_weight=1.0,
                                reduction="mean", avg_factor=None, lamb=LAMB,
                                tm=None):
    """Forward of WeightedCrossEntropyLoss(use_sigmoid=True) (pluld_loss path)."""
    n, c = cls_score.shape
    if weight is None:
        weight = jnp.ones((n,), jnp.float32)

    itemsize = jnp.dtype(cls_score.dtype).itemsize
    if tm is None:
        tm = _pick_tile(n, c, itemsize)
    tm = max(8, (min(tm, ((n + 7) // 8) * 8) // 8) * 8)

    label2d = label.astype(jnp.int32).reshape(n, 1)
    weight2d = weight.astype(jnp.float32).reshape(n, 1)

    nb = pl.cdiv(n, tm)                     # total row blocks
    blocks_per_core = pl.cdiv(nb, _N_PAR)   # row blocks per parallel slice

    def row_map(p, i):
        # clamp so overhang blocks read valid memory; they are masked in-kernel
        return (jnp.minimum(p * blocks_per_core + i, nb - 1), 0)

    kernel = functools.partial(_pluld_loss_kernel, n_rows=n, tm=tm,
                               blocks_per_core=blocks_per_core, lamb=lamb)

    c_pad = ((c + 127) // 128) * 128
    vmem_limit = int(min(48 * 1024 * 1024,
                         max(16 * 1024 * 1024,
                             tm * (5 * c_pad + 2 * 128) * 4 + (8 << 20))))

    partials = pl.pallas_call(
        kernel,
        out_shape=jax.ShapeDtypeStruct((_N_PAR, 8, c), jnp.float32),
        grid_spec=pltpu.PrefetchScalarGridSpec(
            num_scalar_prefetch=0,
            grid=(_N_PAR, blocks_per_core),
            in_specs=[
                pl.BlockSpec((tm, c), row_map),    # cls_score streamed in native dtype
                pl.BlockSpec((tm, 1), row_map),    # labels
                pl.BlockSpec((tm, 1), row_map),    # per-sample weights
            ],
            out_specs=pl.BlockSpec((1, 8, c), lambda p, i: (p, 0, 0)),
        ),
        compiler_params=pltpu.CompilerParams(
            dimension_semantics=("parallel", "arbitrary"),
            vmem_limit_bytes=vmem_limit),
    )(cls_score, label2d, weight2d)

    total = jnp.sum(partials)   # tiny epilogue reduce outside the kernel

    if reduction == "mean":
        denom = jnp.float32(n * c) if avg_factor is None else jnp.float32(avg_factor)
        loss = total / denom
    elif reduction == "sum":
        loss = total
    else:
        # TODO(synk): emit the full elementwise loss map for reduction='none'.
        raise NotImplementedError("reduction='none' not implemented")

    # TODO(synk): tensor-valued pos_weight (rarely used) is not plumbed through.
    return loss_weight * loss


def _reference(cls_score, label, weight, loss_weight=1.0, lamb=LAMB):
    """Direct translation of the PyTorch pluld_loss (mean reduction)."""
    n, c = cls_score.shape
    col = jnp.arange(c)[None, :]
    lab = label.astype(jnp.int32)[:, None]
    bin_lab = jnp.where((lab >= 1) & (col == lab - 1), 1.0, 0.0)
    sig = jax.nn.sigmoid(cls_score.astype(jnp.float32))
    loss = -(bin_lab * jnp.log(sig) + (1.0 - bin_lab) * jnp.log(1.0 - sig) * lamb)
    loss = loss * weight[:, None]
    return loss_weight * jnp.mean(loss)


if __name__ == "__main__":
    key = jax.random.PRNGKey(0)
    k1, k2, k3, k4, k5, k6 = jax.random.split(key, 6)

    # --- test 1: small, tile == full array ---------------------------------
    N, C = 16, 32
    cls_score = jax.random.normal(k1, (N, C), jnp.float32)
    label = jax.random.randint(k2, (N,), 0, C + 1, jnp.int32)   # 0 = background
    weight = jax.random.uniform(k3, (N,), jnp.float32, 0.5, 1.5)

    loss = weighted_cross_entropy_loss(cls_score, label, weight, loss_weight=1.0)
    loss = jax.block_until_ready(loss)
    ref = _reference(cls_score, label, weight, loss_weight=1.0)
    assert jnp.allclose(loss, ref, rtol=1e-4, atol=1e-5), (loss, ref)

    # --- test 2: N not divisible by the tile, multi-block reduction path ----
    N2, C2 = 300, 32
    cls_score2 = jax.random.normal(k4, (N2, C2), jnp.float32) * 3.0
    label2 = jax.random.randint(k5, (N2,), 0, C2 + 1, jnp.int32)
    weight2 = jax.random.uniform(k6, (N2,), jnp.float32, 0.5, 1.5)

    loss2 = weighted_cross_entropy_loss(cls_score2, label2, weight2,
                                        loss_weight=0.5, tm=64)
    loss2 = jax.block_until_ready(loss2)
    ref2 = _reference(cls_score2, label2, weight2, loss_weight=0.5)
    assert jnp.allclose(loss2, ref2, rtol=1e-4, atol=1e-5), (loss2, ref2)

    print("KERNEL_OK")
</pallas_src>

<mosaic_0001>
module attributes {stable_mosaic.version = 11 : i64} {
  func.func @_pluld_loss_kernel(%arg0: i32, %arg1: i32, %arg2: memref<16x32xf32, #tpu.memory_space<vmem>>, %arg3: memref<16x1xi32, #tpu.memory_space<vmem>>, %arg4: memref<16x1xf32, #tpu.memory_space<vmem>>, %arg5: memref<1x8x32xf32, #tpu.memory_space<vmem>>) attributes {dimension_semantics = [#tpu.dimension_semantics<parallel>, #tpu.dimension_semantics<arbitrary>], iteration_bounds = array<i64: 2, 1>, scalar_prefetch = 0 : i64, scratch_operands = 0 : i64, tpu.core_type = #tpu.core_type<tc>, window_params = [{transform_indices = @transform_0, window_bounds = array<i64: 16, 32>}, {transform_indices = @transform_1, window_bounds = array<i64: 16, 1>}, {transform_indices = @transform_2, window_bounds = array<i64: 16, 1>}, {transform_indices = @transform_3, window_bounds = array<i64: 1, 8, 32>}]} {
    %c0_i32 = arith.constant 0 : i32
    %0 = arith.cmpi eq, %arg1, %c0_i32 : i32
    %1 = arith.extui %0 : i1 to i32
    %c0_i32_0 = arith.constant 0 : i32
    %2 = arith.cmpi ne, %1, %c0_i32_0 : i32
    scf.if %2 {
      %cst_23 = arith.constant 0.000000e+00 : f32
      %56 = vector.broadcast %cst_23 : f32 to vector<1x8x32xf32>
      %c0_24 = arith.constant 0 : index
      %c0_25 = arith.constant 0 : index
      %c0_26 = arith.constant 0 : index
      %57 = vector.load %arg5[%c0_24, %c0_25, %c0_26] : memref<1x8x32xf32, #tpu.memory_space<vmem>>, vector<1x8x32xf32>
      tpu.vector_store %arg5[%c0_24, %c0_25, %c0_26], %56 {strides = array<i32>} : memref<1x8x32xf32, #tpu.memory_space<vmem>>, vector<1x8x32xf32>,
    } else {
    }
    %c0 = arith.constant 0 : index
    %c0_1 = arith.constant 0 : index
    %3 = vector.load %arg2[%c0, %c0_1] : memref<16x32xf32, #tpu.memory_space<vmem>>, vector<16x32xf32>
    %c0_2 = arith.constant 0 : index
    %c0_3 = arith.constant 0 : index
    %4 = vector.load %arg3[%c0_2, %c0_3] : memref<16x1xi32, #tpu.memory_space<vmem>>, vector<16x1xi32>
    %c0_4 = arith.constant 0 : index
    %c0_5 = arith.constant 0 : index
    %5 = vector.load %arg4[%c0_4, %c0_5] : memref<16x1xf32, #tpu.memory_space<vmem>>, vector<16x1xf32>
    %6 = tpu.iota {dimensions = array<i32: 1>} : vector<16x32xi32>
    %c1_i32 = arith.constant 1 : i32
    %7 = vector.broadcast %c1_i32 : i32 to vector<16x1xi32>
    %8 = arith.cmpi sge, %4, %7 : vector<16x1xi32>
    %c1_i32_6 = arith.constant 1 : i32
    %9 = vector.broadcast %c1_i32_6 : i32 to vector<16x1xi32>
    %10 = arith.subi %4, %9 : vector<16x1xi32>
    %11 = vector.broadcast %10 : vector<16x1xi32> to vector<16x32xi32>
    %12 = arith.cmpi eq, %6, %11 : vector<16x32xi32>
    %13 = vector.broadcast %8 : vector<16x1xi1> to vector<16x32xi1>
    %14 = arith.andi %13, %12 : vector<16x32xi1>
    %cst = arith.constant 0.000000e+00 : f32
    %15 = vector.broadcast %cst : f32 to vector<16x32xf32>
    %16 = arith.minimumf %3, %15 : vector<16x32xf32>
    %17 = math.absf %3 : vector<16x32xf32>
    %cst_7 = arith.constant 0.000000e+00 : f32
    %18 = vector.broadcast %cst_7 : f32 to vector<16x32xf32>
    %19 = arith.subf %18, %17 : vector<16x32xf32>
    %20 = math.exp %19 : vector<16x32xf32>
    %cst_8 = arith.constant 1.000000e+00 : f32
    %21 = vector.broadcast %cst_8 : f32 to vector<16x32xf32>
    %22 = arith.addf %21, %20 : vector<16x32xf32>
    %23 = math.log %22 : vector<16x32xf32>
    %24 = arith.subf %16, %23 : vector<16x32xf32>
    %cst_9 = arith.constant 1.000000e+00 : f32
    %cst_10 = arith.constant 0.899999976 : f32
    %25 = vector.broadcast %cst_9 : f32 to vector<16x32xf32>
    %26 = vector.broadcast %cst_10 : f32 to vector<16x32xf32>
    %27 = arith.select %14, %25, %26 : vector<16x32xi1>, vector<16x32xf32>
    %cst_11 = arith.constant 0.000000e+00 : f32
    %cst_12 = arith.constant 0.899999976 : f32
    %28 = vector.broadcast %cst_11 : f32 to vector<16x32xf32>
    %29 = vector.broadcast %cst_12 : f32 to vector<16x32xf32>
    %30 = arith.select %14, %28, %29 : vector<16x32xi1>, vector<16x32xf32>
    %31 = arith.mulf %30, %3 : vector<16x32xf32>
    %32 = arith.mulf %27, %24 : vector<16x32xf32>
    %33 = arith.subf %31, %32 : vector<16x32xf32>
    %c1_i32_13 = arith.constant 1 : i32
    %34 = arith.muli %arg0, %c1_i32_13 : i32
    %35 = arith.addi %34, %arg1 : i32
    %c16_i32 = arith.constant 16 : i32
    %36 = arith.muli %35, %c16_i32 : i32
    %37 = tpu.iota {dimensions = array<i32: 0>} : vector<16x1xi32>
    %38 = vector.broadcast %36 : i32 to vector<16x1xi32>
    %39 = arith.addi %38, %37 : vector<16x1xi32>
    %c16_i32_14 = arith.constant 16 : i32
    %40 = vector.broadcast %c16_i32_14 : i32 to vector<16x1xi32>
    %41 = arith.cmpi slt, %39, %40 : vector<16x1xi32>
    %42 = vector.broadcast %5 : vector<16x1xf32> to vector<16x32xf32>
    %43 = arith.mulf %33, %42 : vector<16x32xf32>
    %cst_15 = arith.constant 0.000000e+00 : f32
    %44 = vector.shape_cast %41 : vector<16x1xi1> to vector<16x1xi1>
    %45 = vector.broadcast %44 : vector<16x1xi1> to vector<16x32xi1>
    %46 = vector.broadcast %cst_15 : f32 to vector<16x32xf32>
    %47 = arith.select %45, %43, %46 : vector<16x32xi1>, vector<16x32xf32>
    %c0_16 = arith.constant 0 : index
    %c0_17 = arith.constant 0 : index
    %c0_18 = arith.constant 0 : index
    %48 = vector.load %arg5[%c0_16, %c0_17, %c0_18] : memref<1x8x32xf32, #tpu.memory_space<vmem>>, vector<1x8x32xf32>
    %49 = vector.shape_cast %48 : vector<1x8x32xf32> to vector<8x32xf32>
    %50 = vector.shape_cast %47 : vector<16x32xf32> to vector<2x8x32xf32>
    %cst_19 = arith.constant dense<0.000000e+00> : vector<8x32xf32>
    %51 = vector.multi_reduction <add>, %50, %cst_19 [0] : vector<2x8x32xf32> to vector<8x32xf32>
    %52 = arith.addf %49, %51 : vector<8x32xf32>
    %c0_20 = arith.constant 0 : index
    %c0_21 = arith.constant 0 : index
    %c0_22 = arith.constant 0 : index
    %53 = vector.load %arg5[%c0_20, %c0_21, %c0_22] : memref<1x8x32xf32, #tpu.memory_space<vmem>>, vector<1x8x32xf32>
    %54 = vector.shape_cast %53 : vector<1x8x32xf32> to vector<8x32xf32>
    %55 = vector.shape_cast %52 : vector<8x32xf32> to vector<1x8x32xf32>
    tpu.vector_store %arg5[%c0_20, %c0_21, %c0_22], %55 {strides = array<i32>} : memref<1x8x32xf32, #tpu.memory_space<vmem>>, vector<1x8x32xf32>,
    return
  }
  func.func @transform_0(%arg0: i32, %arg1: i32) -> (i32, i32) {
    %c1_i32 = arith.constant 1 : i32
    %0 = arith.muli %arg0, %c1_i32 : i32
    %1 = arith.addi %0, %arg1 : i32
    %c0_i32 = arith.constant 0 : i32
    %2 = arith.minsi %1, %c0_i32 : i32
    %c0_i32_0 = arith.constant 0 : i32
    %c0_i32_1 = arith.constant 0 : i32
    return %2, %c0_i32_0 : i32, i32
  }
  func.func @transform_1(%arg0: i32, %arg1: i32) -> (i32, i32) {
    %c1_i32 = arith.constant 1 : i32
    %0 = arith.muli %arg0, %c1_i32 : i32
    %1 = arith.addi %0, %arg1 : i32
    %c0_i32 = arith.constant 0 : i32
    %2 = arith.minsi %1, %c0_i32 : i32
    %c0_i32_0 = arith.constant 0 : i32
    %c0_i32_1 = arith.constant 0 : i32
    return %2, %c0_i32_0 : i32, i32
  }
  func.func @transform_2(%arg0: i32, %arg1: i32) -> (i32, i32) {
    %c1_i32 = arith.constant 1 : i32
    %0 = arith.muli %arg0, %c1_i32 : i32
    %1 = arith.addi %0, %arg1 : i32
    %c0_i32 = arith.constant 0 : i32
    %2 = arith.minsi %1, %c0_i32 : i32
    %c0_i32_0 = arith.constant 0 : i32
    %c0_i32_1 = arith.constant 0 : i32
    return %2, %c0_i32_0 : i32, i32
  }
  func.func @transform_3(%arg0: i32, %arg1: i32) -> (i32, i32, i32) {
    %c0_i32 = arith.constant 0 : i32
    %c0_i32_0 = arith.constant 0 : i32
    %c0_i32_1 = arith.constant 0 : i32
    return %arg0, %c0_i32, %c0_i32_0 : i32, i32, i32
  }
}

</mosaic_0001>

<llo_original>
// kernel: tpu_custom_call.1
$region0: #{tpu_custom_call.1}
  #allocation0 [shape = 'u32[]', space=smem, size = 0x4, offset = 0x4, fixed_abs, tag = 'smem constant byte address 0x4 - core index']
  #allocation1 [shape = 'u32[144,128]{1,0:T(1,128)}', space=vmem, size = 0x12000, scoped, tag = 'internal scratch']
  %s0 = inlined_call_operand.vmem [shape: f32[16,32], index: 0, kind: input, shape index: {}]
  %s1 = inlined_call_operand.vmem [shape: s32[16,1], index: 1, kind: input, shape index: {}]
  %s2 = inlined_call_operand.vmem [shape: f32[16,1], index: 2, kind: input, shape index: {}]
  %s3 = inlined_call_operand.hbm [shape: f32[2,8,32], index: 3, kind: output, shape index: {}]
  %s4 = sld [smem:[#allocation0]]
  $region49: #{tpu_custom_call.1} parent=0
    _
  %s6 = ssub.s32 1, %s4
  %s7 = scalar_select 0, %s6, %s4
  $region1: #{tpu_custom_call.1} parent=0
    #allocation2 [shape = 'u8[8192]{0}', space=vmem, size = 0x2000, scoped, tag = 'output window, operand 0']
    #allocation3 [shape = 's32[2]{0}', space=sflag, size = 0x8, scoped, tag = 'scoped memory for tpu_custom_call.1']
    %8 = vsyncpa [#allocation3], 0
    %s9 = scalar_lea.sflag [#allocation3], 1
    %10 = vsyncpa %s9, 0
    loop: start=0, step=1, limit=4
    $region2: #{tpu_custom_call.1} parent=1 // loop_pre_header
      _
    $region3: #{tpu_custom_call.1} parent=1 // loop_header
      %s12 = sphi 0, %s16
      %p13 = scmp.ge.s32.totalorder %s12, 4
      %s19 = sphi 0, %s31
      %s20 = sphi 0, %s27
      %s21 = sphi 0, %s19
      %s22 = sphi 0, %s20
      %s23 = sphi 0, %s21
      %s24 = sphi 0, %s22
      %s40 = sphi 0, %s42
      %s43 = sphi 0, %s40
      %s44 = sphi 0, %s43
      %s60 = sphi 0, %s44
      %s72 = sphi 0, %s74
      %s75 = sphi 0, %s72
      %s76 = sphi 0, %s75
      %s92 = sphi 0, %s76
      %s104 = sphi 0, %s106
      %s107 = sphi 0, %s104
      %s108 = sphi 0, %s107
      %s124 = sphi 0, %s108
      %s130 = sphi 0, %s132
      %s133 = sphi 0, %s130
      %s134 = sphi 0, %s133
      %s150 = sphi 0, %s134
    $region4: #{tpu_custom_call.1} parent=1 // loop_header_branch
      %15 = sbr.rel (%p13) target = $region8
    $region5: #{tpu_custom_call.1} parent=1 // loop_body
      %s17 = ssub.s32 %s12, 1
      %s18 = ssub.s32 %s12, 2
      %s25 = sadd.s32 1, %s20
      %p26 = scmp.ge.s32.totalorder %s25, 1
      %s27 = scalar_select %p26, 0, %s25
      %s28 = sadd.s32 1, %s19
      %s29 = scalar_select %p26, %s28, %s19
      %p30 = scmp.ge.s32.totalorder %s29, 2
      %s31 = scalar_select %p30, 0, %s29
      %s32 = sadd.s32 %s19, %s20
      %p33 = scmp.lt.s32.totalorder %s32, 0
      %s34 = scalar_select %p33, %s32, 0
      %s35 = sadd.s32 %s31, %s27
      %p36 = scmp.lt.s32.totalorder %s35, 0
      %s37 = scalar_select %p36, %s35, 0
      %s38 = ssub.s32 %s34, %s37
      %p39 = scmp.eq.s32.totalorder %s38, 0
      %s41 = sadd.s32 %s40, 1
      %s42 = scalar_select %p39, %s40, %s41
      %p45 = pneg %p39
      %p46 = scmp.eq.s32.totalorder %s12, 1
      %p47 = por %p45, %p46
      %p48 = scmp.ne.s32.totalorder %s40, %s43
      %p49 = scmp.eq.s32.totalorder %s12, 0
      %p50 = por %p48, %p49
      %p51 = scmp.ne.s32.totalorder %s40, %s43
      %p52 = scmp.eq.s32.totalorder %s17, 1
      %p53 = por %p51, %p52
      %p54 = scmp.ne.s32.totalorder %s43, %s44
      %p55 = scmp.eq.s32.totalorder %s17, 0
      %p56 = por %p54, %p55
      %p57 = scmp.ne.s32.totalorder %s43, %s44
      %p58 = scmp.eq.s32.totalorder %s18, 1
      %p59 = por %p57, %p58
      %p61 = scmp.ne.s32.totalorder %s44, %s60
      %p62 = scmp.eq.s32.totalorder %s18, 0
      %p63 = por %p61, %p62
      %s64 = sadd.s32 %s19, %s20
      %p65 = scmp.lt.s32.totalorder %s64, 0
      %s66 = scalar_select %p65, %s64, 0
      %s67 = sadd.s32 %s31, %s27
      %p68 = scmp.lt.s32.totalorder %s67, 0
      %s69 = scalar_select %p68, %s67, 0
      %s70 = ssub.s32 %s66, %s69
      %p71 = scmp.eq.s32.totalorder %s70, 0
      %s73 = sadd.s32 %s72, 1
      %s74 = scalar_select %p71, %s72, %s73
      %p77 = pneg %p71
      %p78 = scmp.eq.s32.totalorder %s12, 1
      %p79 = por %p77, %p78
      %p80 = scmp.ne.s32.totalorder %s72, %s75
      %p81 = scmp.eq.s32.totalorder %s12, 0
      %p82 = por %p80, %p81
      %p83 = scmp.ne.s32.totalorder %s72, %s75
      %p84 = scmp.eq.s32.totalorder %s17, 1
      %p85 = por %p83, %p84
      %p86 = scmp.ne.s32.totalorder %s75, %s76
      %p87 = scmp.eq.s32.totalorder %s17, 0
      %p88 = por %p86, %p87
      %p89 = scmp.ne.s32.totalorder %s75, %s76
      %p90 = scmp.eq.s32.totalorder %s18, 1
      %p91 = por %p89, %p90
      %p93 = scmp.ne.s32.totalorder %s76, %s92
      %p94 = scmp.eq.s32.totalorder %s18, 0
      %p95 = por %p93, %p94
      %s96 = sadd.s32 %s19, %s20
      %p97 = scmp.lt.s32.totalorder %s96, 0
      %s98 = scalar_select %p97, %s96, 0
      %s99 = sadd.s32 %s31, %s27
      %p100 = scmp.lt.s32.totalorder %s99, 0
      %s101 = scalar_select %p100, %s99, 0
      %s102 = ssub.s32 %s98, %s101
      %p103 = scmp.eq.s32.totalorder %s102, 0
      %s105 = sadd.s32 %s104, 1
      %s106 = scalar_select %p103, %s104, %s105
      %p109 = pneg %p103
      %p110 = scmp.eq.s32.totalorder %s12, 1
      %p111 = por %p109, %p110
      %p112 = scmp.ne.s32.totalorder %s104, %s107
      %p113 = scmp.eq.s32.totalorder %s12, 0
      %p114 = por %p112, %p113
      %p115 = scmp.ne.s32.totalorder %s104, %s107
      %p116 = scmp.eq.s32.totalorder %s17, 1
      %p117 = por %p115, %p116
      %p118 = scmp.ne.s32.totalorder %s107, %s108
      %p119 = scmp.eq.s32.totalorder %s17, 0
      %p120 = por %p118, %p119
      %p121 = scmp.ne.s32.totalorder %s107, %s108
      %p122 = scmp.eq.s32.totalorder %s18, 1
      %p123 = por %p121, %p122
      %p125 = scmp.ne.s32.totalorder %s108, %s124
      %p126 = scmp.eq.s32.totalorder %s18, 0
      %p127 = por %p125, %p126
      %s128 = ssub.s32 %s19, %s31
      %p129 = scmp.eq.s32.totalorder %s128, 0
      %s131 = sadd.s32 %s130, 1
      %s132 = scalar_select %p129, %s130, %s131
      %p135 = pneg %p129
      %p136 = scmp.eq.s32.totalorder %s12, 1
      %p137 = por %p135, %p136
      %p138 = scmp.ne.s32.totalorder %s130, %s133
      %p139 = scmp.eq.s32.totalorder %s12, 0
      %p140 = por %p138, %p139
      %p141 = scmp.ne.s32.totalorder %s130, %s133
      %p142 = scmp.eq.s32.totalorder %s17, 1
      %p143 = por %p141, %p142
      %p144 = scmp.ne.s32.totalorder %s133, %s134
      %p145 = scmp.eq.s32.totalorder %s17, 0
      %p146 = por %p144, %p145
      %p147 = scmp.ne.s32.totalorder %s133, %s134
      %p148 = scmp.eq.s32.totalorder %s18, 1
      %p149 = por %p147, %p148
      %p151 = scmp.ne.s32.totalorder %s134, %s150
      %p152 = scmp.eq.s32.totalorder %s18, 0
      %p153 = por %p151, %p152
      %p154 = scmp.le.s32.totalorder 1, %s12
      %p155 = scmp.lt.s32.totalorder %s12, 3
      %p156 = pnand %p154, %p155
      %p157 = pneg %p156
      // Predicated region
      $region9: #{tpu_custom_call.1} parent=5 // pred_check
        _
      $region10: #{tpu_custom_call.1} parent=5 // pred_check_branch
        %159 = sbr.rel (%p156) target = $region12
      $region11: #{tpu_custom_call.1} parent=5 // pred_region
        %s160 = ssub.s32 %s12, 1
      $region12: #{tpu_custom_call.1} parent=5 // pred_fallthru
        _
      %p161 = scmp.lt.s32.totalorder %s12, 2
      // Predicated region
      $region13: #{tpu_custom_call.1} parent=5 // pred_check
        %p162 = pneg %p161
      $region14: #{tpu_custom_call.1} parent=5 // pred_check_branch
        %164 = sbr.rel (%p162) target = $region16
      $region15: #{tpu_custom_call.1} parent=5 // pred_region
        // Predicated region
        $region17: #{tpu_custom_call.1} parent=15 // pred_check
          %p165 = pneg %p50
        $region18: #{tpu_custom_call.1} parent=15 // pred_check_branch
          %167 = sbr.rel (%p165) target = $region20
        $region19: #{tpu_custom_call.1} parent=15 // pred_region
          %s168 = sadd.s32 %s19, %s20
          %p169 = scmp.lt.s32.totalorder %s168, 0
          %s170 = scalar_select %p169, %s168, 0
          %s171 = smul.u32 2, %s170
          %p172 = scmp.lt.s32.totalorder %s171, 1
          %s173 = scalar_select %p172, %s171, 1
          %s174 = smul.addr %s173, 8
          %s175 = scalar_lea.vmem %s0, %s174
          %s176 = sadd.s32 %s19, %s20
          %p177 = scmp.lt.s32.totalorder %s176, 0
          %s178 = scalar_select %p177, %s176, 0
          %s179 = smul.u32 2, %s178
        $region20: #{tpu_custom_call.1} parent=15 // pred_fallthru
          _
        // Predicated region
        $region21: #{tpu_custom_call.1} parent=15 // pred_check
          %p180 = pneg %p82
        $region22: #{tpu_custom_call.1} parent=15 // pred_check_branch
          %182 = sbr.rel (%p180) target = $region24
        $region23: #{tpu_custom_call.1} parent=15 // pred_region
          %s183 = sadd.s32 %s19, %s20
          %p184 = scmp.lt.s32.totalorder %s183, 0
          %s185 = scalar_select %p184, %s183, 0
          %s186 = smul.u32 2, %s185
          %p187 = scmp.lt.s32.totalorder %s186, 1
          %s188 = scalar_select %p187, %s186, 1
          %s189 = smul.addr %s188, 8
          %s190 = scalar_lea.vmem %s1, %s189
          %s191 = sadd.s32 %s19, %s20
          %p192 = scmp.lt.s32.totalorder %s191, 0
          %s193 = scalar_select %p192, %s191, 0
          %s194 = smul.u32 2, %s193
        $region24: #{tpu_custom_call.1} parent=15 // pred_fallthru
          _
        // Predicated region
        $region25: #{tpu_custom_call.1} parent=15 // pred_check
          %p195 = pneg %p114
        $region26: #{tpu_custom_call.1} parent=15 // pred_check_branch
          %197 = sbr.rel (%p195) target = $region28
        $region27: #{tpu_custom_call.1} parent=15 // pred_region
          %s198 = sadd.s32 %s19, %s20
          %p199 = scmp.lt.s32.totalorder %s198, 0
          %s200 = scalar_select %p199, %s198, 0
          %s201 = smul.u32 2, %s200
          %p202 = scmp.lt.s32.totalorder %s201, 1
          %s203 = scalar_select %p202, %s201, 1
          %s204 = smul.addr %s203, 8
          %s205 = scalar_lea.vmem %s2, %s204
          %s206 = sadd.s32 %s19, %s20
          %p207 = scmp.lt.s32.totalorder %s206, 0
          %s208 = scalar_select %p207, %s206, 0
          %s209 = smul.u32 2, %s208
        $region28: #{tpu_custom_call.1} parent=15 // pred_fallthru
          _
      $region16: #{tpu_custom_call.1} parent=5 // pred_fallthru
        _
      %p210 = scmp.le.s32.totalorder 1, %s12
      %p211 = scmp.lt.s32.totalorder %s12, 3
      %p212 = pnand %p210, %p211
      %p213 = pneg %p212
      // Predicated region
      $region29: #{tpu_custom_call.1} parent=5 // pred_check
        _
      $region30: #{tpu_custom_call.1} parent=5 // pred_check_branch
        %215 = sbr.rel (%p212) target = $region32
      $region31: #{tpu_custom_call.1} parent=5 // pred_region
        %s216 = ssub.s32 %s12, 1
        %s217 = sadd.s32 %s21, %s22
        %p218 = scmp.lt.s32.totalorder %s217, 0
        %s219 = scalar_select %p218, %s217, 0
        %s220 = smul.u32 2, %s219
        %p221 = scmp.lt.s32.totalorder %s220, 1
        %s222 = scalar_select %p221, %s220, 1
        %s223 = smul.addr %s222, 8
        %s224 = scalar_lea.vmem %s0, %s223
        %p225 = pneg %p56
        %p226 = pneg %p53
        %s227 = sadd.s32 %s21, %s22
        %p228 = scmp.lt.s32.totalorder %s227, 0
        %s229 = scalar_select %p228, %s227, 0
        %s230 = smul.u32 2, %s229
        %p231 = scmp.lt.s32.totalorder %s230, 1
        %s232 = scalar_select %p231, %s230, 1
        %s233 = smul.addr %s232, 8
        %s234 = scalar_lea.vmem %s1, %s233
        %p235 = pneg %p88
        %p236 = pneg %p85
        %s237 = sadd.s32 %s21, %s22
        %p238 = scmp.lt.s32.totalorder %s237, 0
        %s239 = scalar_select %p238, %s237, 0
        %s240 = smul.u32 2, %s239
        %p241 = scmp.lt.s32.totalorder %s240, 1
        %s242 = scalar_select %p241, %s240, 1
        %s243 = smul.addr %s242, 8
        %s244 = scalar_lea.vmem %s2, %s243
        %p245 = pneg %p120
        %p246 = pneg %p117
        %p247 = pneg %p146
        %p248 = pneg %p143
        %s249 = sand.u32 %s133, 1
        %s250 = scalar_lea.sflag [#allocation3], %s249
        %s251 = sand.u32 %s133, 1
        %s252 = smul.addr %s251, 8
        %s253 = scalar_lea.vmem [#allocation2], %s252
        %s254 = sadd.s32 %s21, %s22
        %p255 = scmp.lt.s32.totalorder %s254, 0
        %s256 = scalar_select %p255, %s254, 0
        %s257 = smul.u32 2, %s256
        %p258 = scmp.lt.s32.totalorder %s257, 1
        %s259 = scalar_select %p258, %s257, 1
        %s260 = smul.addr %s259, 8
        %s261 = scalar_lea.vmem %s0, %s260
        %s262 = sadd.s32 %s21, %s22
        %p263 = scmp.lt.s32.totalorder %s262, 0
        %s264 = scalar_select %p263, %s262, 0
        %s265 = smul.u32 2, %s264
        %s266 = sadd.s32 %s21, %s22
        %p267 = scmp.lt.s32.totalorder %s266, 0
        %s268 = scalar_select %p267, %s266, 0
        %s269 = smul.u32 2, %s268
        %p270 = scmp.lt.s32.totalorder %s269, 1
        %s271 = scalar_select %p270, %s269, 1
        %s272 = smul.addr %s271, 8
        %s273 = scalar_lea.vmem %s1, %s272
        %s274 = sadd.s32 %s21, %s22
        %p275 = scmp.lt.s32.totalorder %s274, 0
        %s276 = scalar_select %p275, %s274, 0
        %s277 = smul.u32 2, %s276
        %s278 = sadd.s32 %s21, %s22
        %p279 = scmp.lt.s32.totalorder %s278, 0
        %s280 = scalar_select %p279, %s278, 0
        %s281 = smul.u32 2, %s280
        %p282 = scmp.lt.s32.totalorder %s281, 1
        %s283 = scalar_select %p282, %s281, 1
        %s284 = smul.addr %s283, 8
        %s285 = scalar_lea.vmem %s2, %s284
        %s286 = sadd.s32 %s21, %s22
        %p287 = scmp.lt.s32.totalorder %s286, 0
        %s288 = scalar_select %p287, %s286, 0
        %s289 = smul.u32 2, %s288
        %p290 = scmp.eq.s32.totalorder %s22, 0
        // Predicated region
        $region33: #{tpu_custom_call.1} parent=31 // pred_check
          %p291 = pneg %p290
        $region34: #{tpu_custom_call.1} parent=31 // pred_check_branch
          %293 = sbr.rel (%p291) target = $region36
        $region35: #{tpu_custom_call.1} parent=31 // pred_region
          %vm294 = vcmask 261120
          %295 = vst.msk [vmem:[%s253] sm:$0xff] %vm294, 0.0
        $region36: #{tpu_custom_call.1} parent=31 // pred_fallthru
          _
        %v296 = vld [vmem:[%s261] sm:$0xff]
        %v297 = vld [vmem:[%s261 + $0x8] sm:$0xff]
        %v298 = vld [vmem:[%s273] sm:$0xff]
        %v299 = vld [vmem:[%s273 + $0x8] sm:$0xff]
        %v300 = vld [vmem:[%s285] sm:$0xff]
        %v301 = vld [vmem:[%s285 + $0x8] sm:$0xff]
        %v302 = vlaneseq
        %v303 = vand.u32 %v302, 127
        %vm304 = vcmp.ge.s32.totalorder %v298, 1
        %vm305 = vcmp.ge.s32.totalorder %v299, 1
        %v306 = vsub.s32 %v298, 1
        %v307 = vsub.s32 %v299, 1
        %308 = vset.pattern.permute.xlu0 0
        %309 = vperm.xlu0 %308, %v306
        %v310 = vpop.permute.xlu0 %309
        %311 = vset.pattern.permute.xlu0 0
        %312 = vperm.xlu0 %311, %v307
        %v313 = vpop.permute.xlu0 %312
        %vm314 = vcmp.eq.s32.totalorder %v303, %v310
        %vm315 = vcmp.eq.s32.totalorder %v303, %v313
        %v316 = vsel %vm304, 1, 0
        %v317 = vsel %vm305, 1, 0
        %318 = vset.pattern.permute.xlu0 0
        %319 = vperm.xlu0 %318, %v316
        %v320 = vpop.permute.xlu0 %319
        %321 = vset.pattern.permute.xlu0 0
        %322 = vperm.xlu0 %321, %v317
        %v323 = vpop.permute.xlu0 %322
        %vm324 = vcmp.eq.s32.totalorder %v320, 1
        %vm325 = vcmp.eq.s32.totalorder %v323, 1
        %vm326 = vmand %vm324, %vm314
        %vm327 = vmand %vm325, %vm315
        %v328 = vmin.f32 %v296, 0.0
        %v329 = vmin.f32 %v297, 0.0
        %v330 = vand.u32 2147483647, %v296
        %v331 = vand.u32 2147483647, %v297
        %v332 = vsub.f32 0.0, %v330
        %v333 = vsub.f32 0.0, %v331
        %v334 = vmul.f32 %v332, 1.442695
        %v335 = vpow.pop %v334
        %v336 = vmul.f32 %v333, 1.442695
        %v337 = vpow.pop %v336
        %v338 = vadd.f32 %v335, 1.0
        %v339 = vadd.f32 %v337, 1.0
        %v340 = vlog2.pop %v338
        %v341 = vmul.f32 %v340, 0.6931472
        %v342 = vlog2.pop %v339
        %v343 = vmul.f32 %v342, 0.6931472
        %v344 = vsub.f32 %v328, %v341
        %v345 = vsub.f32 %v329, %v343
        %v346 = vsel %vm326, 1.0, 0.9
        %v347 = vsel %vm327, 1.0, 0.9
        %v348 = vsel %vm326, 0.0, 0.9
        %v349 = vsel %vm327, 0.0, 0.9
        %v350 = vmul.f32 %v348, %v296
        %v351 = vmul.f32 %v349, %v297
        %v352 = vmul.f32 %v346, %v344
        %v353 = vmul.f32 %v347, %v345
        %v354 = vsub.f32 %v350, %v352
        %v355 = vsub.f32 %v351, %v353
        %s356 = sadd.s32 %s21, %s22
        %s357 = smul.u32 %s356, 16
        %v358 = vlaneseq
        %v359 = vshrl.u32 %v358, 7
        %v360 = vadd.s32 %v359, 8
        %v361 = vstv %s357
        %v362 = vadd.s32 %v361, %v359
        %v363 = vadd.s32 %v361, %v360
        %vm364 = vcmp.lt.s32.totalorder %v362, 16
        %vm365 = vcmp.lt.s32.totalorder %v363, 16
        %367 = vset.pattern.permute.xlu0 0
        %368 = vperm.xlu0 %367, %v300
        %v369 = vpop.permute.xlu0 %368
        %372 = vset.pattern.permute.xlu0 0
        %373 = vperm.xlu0 %372, %v301
        %v374 = vpop.permute.xlu0 %373
        %v376 = vmul.f32 %v354, %v369
        %v377 = vmul.f32 %v355, %v374
        %v378 = vsel %vm364, 1, 0
        %v379 = vsel %vm365, 1, 0
        %vm380 = vcmp.eq.s32.totalorder %v378, 1
        %vm381 = vcmp.eq.s32.totalorder %v379, 1
        %v382 = vsel %vm380, %v376, 0.0
        %v383 = vsel %vm381, %v377, 0.0
        %v384 = vld [vmem:[%s253] sm:$0xff]
        %vm385 = vcmask 261120
        %v386 = vsel %vm385, %v382, 0.0
        %v387 = vsel %vm385, %v383, 0.0
        %v388 = vadd.f32 %v386, %v387
        %v389 = vadd.f32 %v384, %v388
        %390 = vst.msk [vmem:[%s253] sm:$0xff] %vm385, %v389
        %s391 = sand.u32 %s133, 1
        %s392 = scalar_lea.sflag [#allocation3], %s391
        %s393 = sand.u32 %s133, 1
        %s394 = smul.addr %s393, 8
        %s395 = scalar_lea.vmem [#allocation2], %s394
        // Predicated region
        $region37: #{tpu_custom_call.1} parent=31 // pred_check
          %p396 = pneg %p143
        $region38: #{tpu_custom_call.1} parent=31 // pred_check_branch
          %398 = sbr.rel (%p396) target = $region40
        $region39: #{tpu_custom_call.1} parent=31 // pred_region
          %s400 = ssub.s32 128, 128
          %401 = vsyncadd %s392, %s400
          %s402 = smul.addr %s21, 128
          %s403 = scalar_lea.hbm %s3, %s402
          %s405 = sshll.u32 %s395, 4
          %s406 = int_to_ptr.vmem [resolvable:$true] %s405
          %408 = dma.vmem_to_hbm [thread:$0]  %s406, 128, %s403, %s392
        $region40: #{tpu_custom_call.1} parent=31 // pred_fallthru
          _
      $region32: #{tpu_custom_call.1} parent=5 // pred_fallthru
        _
      %p409 = scmp.le.s32.totalorder 2, %s12
      // Predicated region
      $region41: #{tpu_custom_call.1} parent=5 // pred_check
        %p410 = pneg %p409
      $region42: #{tpu_custom_call.1} parent=5 // pred_check_branch
        %412 = sbr.rel (%p410) target = $region44
      $region43: #{tpu_custom_call.1} parent=5 // pred_region
        %s413 = ssub.s32 %s12, 2
        // Predicated region
        $region45: #{tpu_custom_call.1} parent=43 // pred_check
          %p414 = pneg %p149
        $region46: #{tpu_custom_call.1} parent=43 // pred_check_branch
          %416 = sbr.rel (%p414) target = $region48
        $region47: #{tpu_custom_call.1} parent=43 // pred_region
          %s417 = sand.u32 %s134, 1
          %s418 = scalar_lea.sflag [#allocation3], %s417
          %s419 = sand.u32 %s134, 1
          %s420 = smul.addr %s419, 8
          %s421 = scalar_lea.vmem [#allocation2], %s420
          %422 = dma.done %s418, 128
        $region48: #{tpu_custom_call.1} parent=43 // pred_fallthru
          _
      $region44: #{tpu_custom_call.1} parent=5 // pred_fallthru
        _
    $region6: #{tpu_custom_call.1} parent=1 // loop_footer
      %s16 = sadd.s32 1, %s12
    $region7: #{tpu_custom_call.1} parent=1 // loop_footer_branch
      %11 = sbr.rel target = $region3
    $region8: #{tpu_custom_call.1} parent=1 // loop_exit
      _
    %423 = vsyncpa [#allocation3], 1
    %s424 = scalar_lea.sflag [#allocation3], 1
    %425 = vsyncpa %s424, 1

</llo_original>
